<compile_context>
chip_gen: v6e
topology: v6e:2x2x1
jax: 0.10.0
libtpu: 0.0.40
codegen_flags: <defaults>
</compile_context>

<pallas_src>
import functools

import jax
import jax.numpy as jnp
from jax.experimental import pallas as pl
from jax.experimental.pallas import tpu as pltpu


def _round_up(x, m):
    return (x + m - 1) // m * m


def _cdiv(a, b):
    return -(-a // b)


def _physical_vmem_bytes():
    """Best-effort physical VMEM query; conservative (v7x) fallback."""
    try:
        info = pltpu.get_tpu_info()
        cap = getattr(info, "vmem_capacity_bytes", 0)
        if cap:
            return int(cap)
    except Exception:
        pass
    return 64 * 1024 * 1024


_VMEM_PHYSICAL = _physical_vmem_bytes()


def _autoencoder_kernel(x_ref, w1_ref, b1_ref, w2_ref, b2_ref, out_ref):
    # x_ref : (tb, input_dim)           original input dtype (cast in-kernel)
    # w1_ref: (input_dim, enc_pad)      pre-transposed, zero-padded
    # b1_ref: (1, enc_pad)              f32
    # w2_ref: (enc_pad, in_pad)         pre-transposed, zero-padded
    # b2_ref: (1, in_pad)               f32
    # out_ref: (tb, in_pad)             lane-dense (in_pad % 128 == 0)
    x = x_ref[...].astype(w1_ref.dtype)   # in-kernel cast: no extra HBM pass

    # Encoder: ReLU(x @ W1^T + b1)  -- MXU matmul, f32 accumulation.
    h = jnp.dot(x, w1_ref[...], preferred_element_type=jnp.float32)
    h = jnp.maximum(h + b1_ref[...], 0.0)

    # Decoder: ReLU(h @ W2^T + b2)
    y = jnp.dot(h.astype(w2_ref.dtype), w2_ref[...],
                preferred_element_type=jnp.float32)
    y = jnp.maximum(y + b2_ref[...], 0.0)

    out_ref[...] = y.astype(out_ref.dtype)


def prepare_params(w1, b1, w2, b2, compute_dtype=jnp.float32, lane=128):
    """One-time parameter prep (outside the per-call jit path).

    Inputs are in PyTorch nn.Linear layout:
      w1: (encoding_dim, input_dim), b1: (encoding_dim,)
      w2: (input_dim, encoding_dim), b2: (input_dim,)
    Returns transposed, zero-padded, (optionally bf16-cast) params:
      w1t: (input_dim, enc_pad), b1p: (1, enc_pad)   [f32 bias]
      w2t: (enc_pad,  in_pad),   b2p: (1, in_pad)    [f32 bias]
    """
    enc_dim, in_dim = w1.shape
    enc_pad = _round_up(enc_dim, lane)
    in_pad = _round_up(in_dim, lane)

    w1t = jnp.zeros((in_dim, enc_pad), compute_dtype)
    w1t = w1t.at[:, :enc_dim].set(w1.T.astype(compute_dtype))
    b1p = jnp.zeros((1, enc_pad), jnp.float32)
    b1p = b1p.at[:, :enc_dim].set(b1.astype(jnp.float32))

    w2t = jnp.zeros((enc_pad, in_pad), compute_dtype)
    w2t = w2t.at[:enc_dim, :in_dim].set(w2.T.astype(compute_dtype))
    b2p = jnp.zeros((1, in_pad), jnp.float32)
    b2p = b2p.at[:, :in_dim].set(b2.astype(jnp.float32))

    return w1t, b1p, w2t, b2p


@functools.partial(jax.jit, static_argnames=("batch_tile",))
def autoencoder_forward(x, w1t, b1p, w2t, b2p, batch_tile=512):
    """x: (B, input_dim). Params from `prepare_params`. Returns (B, input_dim)."""
    B, in_dim = x.shape
    in_dim_w, enc_pad = w1t.shape
    in_pad = w2t.shape[1]
    assert in_dim_w == in_dim, "x feature dim must match prepared w1t rows"
    out_dtype = x.dtype

    # Batch tile: f32 x/out blocks -> 8-row sublane granularity.  Cap at
    # ~ceil(B/2) so small batches still produce >=2 grid steps (keeps both
    # v7x TensorCores busy); large batches use the full batch_tile.
    sub = 8
    tb = min(batch_tile, _round_up(_cdiv(B, 2), sub))
    tb = max(_round_up(tb, sub), sub)
    grid = (_cdiv(B, tb),)

    # VMEM budget derived from the real footprint, capped below physical VMEM.
    x_item = jnp.dtype(x.dtype).itemsize
    w_item = jnp.dtype(w1t.dtype).itemsize
    o_item = jnp.dtype(out_dtype).itemsize
    x_tile_b = tb * in_dim * x_item
    o_tile_b = tb * in_pad * o_item
    w_bytes = (in_dim * enc_pad + enc_pad * in_pad) * w_item
    bias_bytes = (enc_pad + in_pad) * 4
    interm_bytes = tb * (enc_pad + in_pad) * 4          # h / y f32 temporaries
    footprint = 2 * (x_tile_b + o_tile_b) + w_bytes + bias_bytes + interm_bytes
    vmem_limit = int(min(max(2 * footprint + (4 << 20), 32 << 20),
                         int(0.85 * _VMEM_PHYSICAL)))

    cost = pl.CostEstimate(
        flops=2 * B * in_dim * enc_pad + 2 * B * enc_pad * in_pad,
        transcendentals=0,
        bytes_accessed=B * in_dim * x_item + w_bytes + bias_bytes
        + B * in_pad * o_item,
    )

    out = pl.pallas_call(
        _autoencoder_kernel,
        out_shape=jax.ShapeDtypeStruct((B, in_pad), out_dtype),
        grid_spec=pl.GridSpec(
            grid=grid,
            in_specs=[
                # x tile: last dim equals the full array dim (no lane padding
                # needed on the input side); dtype cast happens in-kernel.
                pl.BlockSpec((tb, in_dim), lambda i: (i, 0)),
                # Grid-invariant weights/biases: single-buffered so only one
                # VMEM copy is allocated (matters on v7x's 64 MiB VMEM).
                pl.BlockSpec((in_dim, enc_pad), lambda i: (0, 0),
                             pipeline_mode=pl.Buffered(1)),
                pl.BlockSpec((1, enc_pad), lambda i: (0, 0),
                             pipeline_mode=pl.Buffered(1)),
                pl.BlockSpec((enc_pad, in_pad), lambda i: (0, 0),
                             pipeline_mode=pl.Buffered(1)),
                pl.BlockSpec((1, in_pad), lambda i: (0, 0),
                             pipeline_mode=pl.Buffered(1)),
            ],
            out_specs=pl.BlockSpec((tb, in_pad), lambda i: (i, 0)),
        ),
        compiler_params=pltpu.CompilerParams(
            dimension_semantics=("parallel",),
            vmem_limit_bytes=vmem_limit,
        ),
        cost_estimate=cost,
    )(x, w1t, b1p, w2t, b2p)

    if in_pad != in_dim:
        # TODO(synk): for in_dim % 128 != 0, consider returning the lane-padded
        # array and fusing this column slice into the consumer instead.
        out = out[:, :in_dim]
    return out


def init_params(key, input_dim, encoding_dim, dtype=jnp.float32):
    """nn.Linear-shaped params with PyTorch's default uniform init."""
    k1, k2, k3, k4 = jax.random.split(key, 4)
    lim1 = 1.0 / jnp.sqrt(input_dim)
    lim2 = 1.0 / jnp.sqrt(encoding_dim)
    w1 = jax.random.uniform(k1, (encoding_dim, input_dim), dtype, -lim1, lim1)
    b1 = jax.random.uniform(k2, (encoding_dim,), dtype, -lim1, lim1)
    w2 = jax.random.uniform(k3, (input_dim, encoding_dim), dtype, -lim2, lim2)
    b2 = jax.random.uniform(k4, (input_dim,), dtype, -lim2, lim2)
    return w1, b1, w2, b2


def reference_forward(x, w1, b1, w2, b2):
    h = jnp.maximum(x @ w1.T + b1, 0.0)
    return jnp.maximum(h @ w2.T + b2, 0.0)


if __name__ == "__main__":
    key = jax.random.PRNGKey(0)
    kx, kp = jax.random.split(key)

    batch = 300            # deliberately not a multiple of the tile
    input_dim = 64
    encoding_dim = 32

    x = jax.random.normal(kx, (batch, input_dim), jnp.float32)
    w1, b1, w2, b2 = init_params(kp, input_dim, encoding_dim)
    ref = reference_forward(x, w1, b1, w2, b2)

    # f32 path (exact match with the PyTorch-style reference).
    p32 = prepare_params(w1, b1, w2, b2, compute_dtype=jnp.float32)
    out32 = autoencoder_forward(x, *p32)
    out32 = jax.block_until_ready(out32)
    assert out32.shape == (batch, input_dim)
    assert jnp.allclose(out32, ref, atol=1e-5, rtol=1e-5), "f32 mismatch vs reference"

    # bf16 weight-streaming path (halves weight HBM traffic; looser tolerance).
    pbf16 = prepare_params(w1, b1, w2, b2, compute_dtype=jnp.bfloat16)
    outbf = autoencoder_forward(x, *pbf16)
    outbf = jax.block_until_ready(outbf)
    assert outbf.shape == (batch, input_dim)
    assert jnp.allclose(outbf, ref, atol=5e-2, rtol=5e-2), "bf16 mismatch vs reference"

    print("KERNEL_OK")
</pallas_src>

<mosaic_0001>
module attributes {stable_mosaic.version = 11 : i64} {
  func.func @_autoencoder_kernel(%arg0: i32, %arg1: memref<152x64xf32, #tpu.memory_space<vmem>>, %arg2: memref<64x128xf32, #tpu.memory_space<vmem>>, %arg3: memref<1x128xf32, #tpu.memory_space<vmem>>, %arg4: memref<128x128xf32, #tpu.memory_space<vmem>>, %arg5: memref<1x128xf32, #tpu.memory_space<vmem>>, %arg6: memref<152x128xf32, #tpu.memory_space<vmem>>) attributes {dimension_semantics = [#tpu.dimension_semantics<parallel>], iteration_bounds = array<i64: 2>, scalar_prefetch = 0 : i64, scratch_operands = 0 : i64, tpu.core_type = #tpu.core_type<tc>, window_params = [{transform_indices = @transform_0, window_bounds = array<i64: 152, 64>}, {pipeline_mode = #tpu.pipeline_mode<synchronous>, transform_indices = @transform_1, window_bounds = array<i64: 64, 128>}, {pipeline_mode = #tpu.pipeline_mode<synchronous>, transform_indices = @transform_2, window_bounds = array<i64: 1, 128>}, {pipeline_mode = #tpu.pipeline_mode<synchronous>, transform_indices = @transform_3, window_bounds = array<i64: 128, 128>}, {pipeline_mode = #tpu.pipeline_mode<synchronous>, transform_indices = @transform_4, window_bounds = array<i64: 1, 128>}, {transform_indices = @transform_5, window_bounds = array<i64: 152, 128>}]} {
    %c0 = arith.constant 0 : index
    %c0_0 = arith.constant 0 : index
    %0 = vector.load %arg1[%c0, %c0_0] : memref<152x64xf32, #tpu.memory_space<vmem>>, vector<152x64xf32>
    %c0_1 = arith.constant 0 : index
    %c0_2 = arith.constant 0 : index
    %1 = vector.load %arg2[%c0_1, %c0_2] : memref<64x128xf32, #tpu.memory_space<vmem>>, vector<64x128xf32>
    %cst = arith.constant dense<0.000000e+00> : vector<152x128xf32>
    %2 = tpu.matmul %0, %1, %cst {dimension_numbers = #tpu.dot_dimension_numbers<[1], [0], [0], [1], [0, 0, 1, 1], [], []>} : vector<152x64xf32>, vector<64x128xf32>, vector<152x128xf32> -> vector<152x128xf32>
    %c0_3 = arith.constant 0 : index
    %c0_4 = arith.constant 0 : index
    %3 = vector.load %arg3[%c0_3, %c0_4] : memref<1x128xf32, #tpu.memory_space<vmem>>, vector<1x128xf32>
    %4 = vector.broadcast %3 : vector<1x128xf32> to vector<152x128xf32>
    %5 = arith.addf %2, %4 : vector<152x128xf32>
    %cst_5 = arith.constant 0.000000e+00 : f32
    %6 = vector.broadcast %cst_5 : f32 to vector<152x128xf32>
    %7 = arith.maximumf %5, %6 : vector<152x128xf32>
    %c0_6 = arith.constant 0 : index
    %c0_7 = arith.constant 0 : index
    %8 = vector.load %arg4[%c0_6, %c0_7] : memref<128x128xf32, #tpu.memory_space<vmem>>, vector<128x128xf32>
    %cst_8 = arith.constant dense<0.000000e+00> : vector<152x128xf32>
    %9 = tpu.matmul %7, %8, %cst_8 {dimension_numbers = #tpu.dot_dimension_numbers<[1], [0], [0], [1], [0, 0, 1, 1], [], []>} : vector<152x128xf32>, vector<128x128xf32>, vector<152x128xf32> -> vector<152x128xf32>
    %c0_9 = arith.constant 0 : index
    %c0_10 = arith.constant 0 : index
    %10 = vector.load %arg5[%c0_9, %c0_10] : memref<1x128xf32, #tpu.memory_space<vmem>>, vector<1x128xf32>
    %11 = vector.broadcast %10 : vector<1x128xf32> to vector<152x128xf32>
    %12 = arith.addf %9, %11 : vector<152x128xf32>
    %cst_11 = arith.constant 0.000000e+00 : f32
    %13 = vector.broadcast %cst_11 : f32 to vector<152x128xf32>
    %14 = arith.maximumf %12, %13 : vector<152x128xf32>
    %c0_12 = arith.constant 0 : index
    %c0_13 = arith.constant 0 : index
    %15 = vector.load %arg6[%c0_12, %c0_13] : memref<152x128xf32, #tpu.memory_space<vmem>>, vector<152x128xf32>
    tpu.vector_store %arg6[%c0_12, %c0_13], %14 {strides = array<i32>} : memref<152x128xf32, #tpu.memory_space<vmem>>, vector<152x128xf32>,
    return
  }
  func.func @transform_0(%arg0: i32) -> (i32, i32) {
    %c0_i32 = arith.constant 0 : i32
    %c0_i32_0 = arith.constant 0 : i32
    return %arg0, %c0_i32 : i32, i32
  }
  func.func @transform_1(%arg0: i32) -> (i32, i32) {
    %c0_i32 = arith.constant 0 : i32
    %c0_i32_0 = arith.constant 0 : i32
    %c0_i32_1 = arith.constant 0 : i32
    return %c0_i32, %c0_i32_0 : i32, i32
  }
  func.func @transform_2(%arg0: i32) -> (i32, i32) {
    %c0_i32 = arith.constant 0 : i32
    %c0_i32_0 = arith.constant 0 : i32
    %c0_i32_1 = arith.constant 0 : i32
    return %c0_i32, %c0_i32_0 : i32, i32
  }
  func.func @transform_3(%arg0: i32) -> (i32, i32) {
    %c0_i32 = arith.constant 0 : i32
    %c0_i32_0 = arith.constant 0 : i32
    %c0_i32_1 = arith.constant 0 : i32
    return %c0_i32, %c0_i32_0 : i32, i32
  }
  func.func @transform_4(%arg0: i32) -> (i32, i32) {
    %c0_i32 = arith.constant 0 : i32
    %c0_i32_0 = arith.constant 0 : i32
    %c0_i32_1 = arith.constant 0 : i32
    return %c0_i32, %c0_i32_0 : i32, i32
  }
  func.func @transform_5(%arg0: i32) -> (i32, i32) {
    %c0_i32 = arith.constant 0 : i32
    %c0_i32_0 = arith.constant 0 : i32
    return %arg0, %c0_i32 : i32, i32
  }
}

</mosaic_0001>

<llo_original>
// kernel: autoencoder_forward.1
$region0: #{autoencoder_forward.1}
  #allocation0 [shape = 'u32[]', space=smem, size = 0x4, offset = 0x4, fixed_abs, tag = 'smem constant byte address 0x4 - core index']
  #allocation1 [shape = 'u32[144,128]{1,0:T(1,128)}', space=vmem, size = 0x12000, scoped, tag = 'internal scratch']
  %s0 = inlined_call_operand.vmem [shape: f32[300,64], index: 0, kind: input, shape index: {}]
  %s1 = inlined_call_operand.vmem [shape: f32[64,128], index: 1, kind: input, shape index: {}]
  %s2 = inlined_call_operand.vmem [shape: f32[1,128], index: 2, kind: input, shape index: {}]
  %s3 = inlined_call_operand.vmem [shape: f32[128,128], index: 3, kind: input, shape index: {}]
  %s4 = inlined_call_operand.vmem [shape: f32[1,128], index: 4, kind: input, shape index: {}]
  %s5 = inlined_call_operand.vmem [shape: f32[300,128], index: 5, kind: output, shape index: {}]
  %s6 = sld [smem:[#allocation0]]
  $region53: #{autoencoder_forward.1} parent=0
    _
  %s8 = ssub.s32 1, %s6
  %s9 = scalar_select 0, %s8, %s6
  loop: start=0, step=1, limit=4
  $region2: #{autoencoder_forward.1} parent=0 // loop_pre_header
    _
  $region3: #{autoencoder_forward.1} parent=0 // loop_header
    %s11 = sphi 0, %s15
    %p12 = scmp.ge.s32.totalorder %s11, 4
    %s21 = sphi 0, %s23
    %s24 = sphi 0, %s21
    %s25 = sphi 0, %s24
    %s41 = sphi 0, %s25
    %s45 = sphi 0, %s45
    %s47 = sphi 0, %s45
    %s48 = sphi 0, %s47
    %s62 = sphi 0, %s48
    %s66 = sphi 0, %s66
    %s68 = sphi 0, %s66
    %s69 = sphi 0, %s68
    %s83 = sphi 0, %s69
    %s87 = sphi 0, %s87
    %s89 = sphi 0, %s87
    %s90 = sphi 0, %s89
    %s104 = sphi 0, %s90
    %s108 = sphi 0, %s108
    %s110 = sphi 0, %s108
    %s111 = sphi 0, %s110
    %s125 = sphi 0, %s111
    %s131 = sphi 0, %s133
    %s134 = sphi 0, %s131
    %s135 = sphi 0, %s134
    %s151 = sphi 0, %s135
  $region4: #{autoencoder_forward.1} parent=0 // loop_header_branch
    %14 = sbr.rel (%p12) target = $region8
  $region5: #{autoencoder_forward.1} parent=0 // loop_body
    %s16 = ssub.s32 %s11, 1
    %s17 = ssub.s32 %s11, 2
    %s18 = sadd.s32 %s11, 1
    %s19 = ssub.s32 %s11, %s18
    %p20 = scmp.eq.s32.totalorder %s19, 0
    %s22 = sadd.s32 %s21, 1
    %s23 = scalar_select %p20, %s21, %s22
    %p26 = pneg %p20
    %p27 = scmp.eq.s32.totalorder %s11, 1
    %p28 = por %p26, %p27
    %p29 = scmp.ne.s32.totalorder %s21, %s24
    %p30 = scmp.eq.s32.totalorder %s11, 0
    %p31 = por %p29, %p30
    %p32 = scmp.ne.s32.totalorder %s21, %s24
    %p33 = scmp.eq.s32.totalorder %s16, 1
    %p34 = por %p32, %p33
    %p35 = scmp.ne.s32.totalorder %s24, %s25
    %p36 = scmp.eq.s32.totalorder %s16, 0
    %p37 = por %p35, %p36
    %p38 = scmp.ne.s32.totalorder %s24, %s25
    %p39 = scmp.eq.s32.totalorder %s17, 1
    %p40 = por %p38, %p39
    %p42 = scmp.ne.s32.totalorder %s25, %s41
    %p43 = scmp.eq.s32.totalorder %s17, 0
    %p44 = por %p42, %p43
    %s46 = sadd.s32 %s45, 1
    %p49 = scmp.eq.s32.totalorder %s11, 1
    %p50 = scmp.ne.s32.totalorder %s45, %s47
    %p51 = scmp.eq.s32.totalorder %s11, 0
    %p52 = por %p50, %p51
    %p53 = scmp.ne.s32.totalorder %s45, %s47
    %p54 = scmp.eq.s32.totalorder %s16, 1
    %p55 = por %p53, %p54
    %p56 = scmp.ne.s32.totalorder %s47, %s48
    %p57 = scmp.eq.s32.totalorder %s16, 0
    %p58 = por %p56, %p57
    %p59 = scmp.ne.s32.totalorder %s47, %s48
    %p60 = scmp.eq.s32.totalorder %s17, 1
    %p61 = por %p59, %p60
    %p63 = scmp.ne.s32.totalorder %s48, %s62
    %p64 = scmp.eq.s32.totalorder %s17, 0
    %p65 = por %p63, %p64
    %s67 = sadd.s32 %s66, 1
    %p70 = scmp.eq.s32.totalorder %s11, 1
    %p71 = scmp.ne.s32.totalorder %s66, %s68
    %p72 = scmp.eq.s32.totalorder %s11, 0
    %p73 = por %p71, %p72
    %p74 = scmp.ne.s32.totalorder %s66, %s68
    %p75 = scmp.eq.s32.totalorder %s16, 1
    %p76 = por %p74, %p75
    %p77 = scmp.ne.s32.totalorder %s68, %s69
    %p78 = scmp.eq.s32.totalorder %s16, 0
    %p79 = por %p77, %p78
    %p80 = scmp.ne.s32.totalorder %s68, %s69
    %p81 = scmp.eq.s32.totalorder %s17, 1
    %p82 = por %p80, %p81
    %p84 = scmp.ne.s32.totalorder %s69, %s83
    %p85 = scmp.eq.s32.totalorder %s17, 0
    %p86 = por %p84, %p85
    %s88 = sadd.s32 %s87, 1
    %p91 = scmp.eq.s32.totalorder %s11, 1
    %p92 = scmp.ne.s32.totalorder %s87, %s89
    %p93 = scmp.eq.s32.totalorder %s11, 0
    %p94 = por %p92, %p93
    %p95 = scmp.ne.s32.totalorder %s87, %s89
    %p96 = scmp.eq.s32.totalorder %s16, 1
    %p97 = por %p95, %p96
    %p98 = scmp.ne.s32.totalorder %s89, %s90
    %p99 = scmp.eq.s32.totalorder %s16, 0
    %p100 = por %p98, %p99
    %p101 = scmp.ne.s32.totalorder %s89, %s90
    %p102 = scmp.eq.s32.totalorder %s17, 1
    %p103 = por %p101, %p102
    %p105 = scmp.ne.s32.totalorder %s90, %s104
    %p106 = scmp.eq.s32.totalorder %s17, 0
    %p107 = por %p105, %p106
    %s109 = sadd.s32 %s108, 1
    %p112 = scmp.eq.s32.totalorder %s11, 1
    %p113 = scmp.ne.s32.totalorder %s108, %s110
    %p114 = scmp.eq.s32.totalorder %s11, 0
    %p115 = por %p113, %p114
    %p116 = scmp.ne.s32.totalorder %s108, %s110
    %p117 = scmp.eq.s32.totalorder %s16, 1
    %p118 = por %p116, %p117
    %p119 = scmp.ne.s32.totalorder %s110, %s111
    %p120 = scmp.eq.s32.totalorder %s16, 0
    %p121 = por %p119, %p120
    %p122 = scmp.ne.s32.totalorder %s110, %s111
    %p123 = scmp.eq.s32.totalorder %s17, 1
    %p124 = por %p122, %p123
    %p126 = scmp.ne.s32.totalorder %s111, %s125
    %p127 = scmp.eq.s32.totalorder %s17, 0
    %p128 = por %p126, %p127
    %s129 = ssub.s32 %s11, %s18
    %p130 = scmp.eq.s32.totalorder %s129, 0
    %s132 = sadd.s32 %s131, 1
    %s133 = scalar_select %p130, %s131, %s132
    %p136 = pneg %p130
    %p137 = scmp.eq.s32.totalorder %s11, 1
    %p138 = por %p136, %p137
    %p139 = scmp.ne.s32.totalorder %s131, %s134
    %p140 = scmp.eq.s32.totalorder %s11, 0
    %p141 = por %p139, %p140
    %p142 = scmp.ne.s32.totalorder %s131, %s134
    %p143 = scmp.eq.s32.totalorder %s16, 1
    %p144 = por %p142, %p143
    %p145 = scmp.ne.s32.totalorder %s134, %s135
    %p146 = scmp.eq.s32.totalorder %s16, 0
    %p147 = por %p145, %p146
    %p148 = scmp.ne.s32.totalorder %s134, %s135
    %p149 = scmp.eq.s32.totalorder %s17, 1
    %p150 = por %p148, %p149
    %p152 = scmp.ne.s32.totalorder %s135, %s151
    %p153 = scmp.eq.s32.totalorder %s17, 0
    %p154 = por %p152, %p153
    %p155 = scmp.le.s32.totalorder 1, %s11
    %p156 = scmp.lt.s32.totalorder %s11, 3
    %p157 = pnand %p155, %p156
    %p158 = pneg %p157
    // Predicated region
    $region9: #{autoencoder_forward.1} parent=5 // pred_check
      _
    $region10: #{autoencoder_forward.1} parent=5 // pred_check_branch
      %160 = sbr.rel (%p157) target = $region12
    $region11: #{autoencoder_forward.1} parent=5 // pred_region
      %s161 = ssub.s32 %s11, 1
      // Predicated region
      $region13: #{autoencoder_forward.1} parent=11 // pred_check
        %p162 = pneg %p58
      $region14: #{autoencoder_forward.1} parent=11 // pred_check_branch
        %164 = sbr.rel (%p162) target = $region16
      $region15: #{autoencoder_forward.1} parent=11 // pred_region
        _
      $region16: #{autoencoder_forward.1} parent=11 // pred_fallthru
        _
      // Predicated region
      $region17: #{autoencoder_forward.1} parent=11 // pred_check
        %p165 = pneg %p79
      $region18: #{autoencoder_forward.1} parent=11 // pred_check_branch
        %167 = sbr.rel (%p165) target = $region20
      $region19: #{autoencoder_forward.1} parent=11 // pred_region
        _
      $region20: #{autoencoder_forward.1} parent=11 // pred_fallthru
        _
      // Predicated region
      $region21: #{autoencoder_forward.1} parent=11 // pred_check
        %p168 = pneg %p100
      $region22: #{autoencoder_forward.1} parent=11 // pred_check_branch
        %170 = sbr.rel (%p168) target = $region24
      $region23: #{autoencoder_forward.1} parent=11 // pred_region
        _
      $region24: #{autoencoder_forward.1} parent=11 // pred_fallthru
        _
      // Predicated region
      $region25: #{autoencoder_forward.1} parent=11 // pred_check
        %p171 = pneg %p121
      $region26: #{autoencoder_forward.1} parent=11 // pred_check_branch
        %173 = sbr.rel (%p171) target = $region28
      $region27: #{autoencoder_forward.1} parent=11 // pred_region
        _
      $region28: #{autoencoder_forward.1} parent=11 // pred_fallthru
        _
    $region12: #{autoencoder_forward.1} parent=5 // pred_fallthru
      _
    %p174 = scmp.lt.s32.totalorder %s11, 2
    // Predicated region
    $region29: #{autoencoder_forward.1} parent=5 // pred_check
      %p175 = pneg %p174
    $region30: #{autoencoder_forward.1} parent=5 // pred_check_branch
      %177 = sbr.rel (%p175) target = $region32
    $region31: #{autoencoder_forward.1} parent=5 // pred_region
      // Predicated region
      $region33: #{autoencoder_forward.1} parent=31 // pred_check
        %p178 = pneg %p31
      $region34: #{autoencoder_forward.1} parent=31 // pred_check_branch
        %180 = sbr.rel (%p178) target = $region36
      $region35: #{autoencoder_forward.1} parent=31 // pred_region
        %s181 = smul.u32 19, %s11
        %p182 = scmp.lt.s32.totalorder %s181, 37
        %s183 = scalar_select %p182, %s181, 37
        %s184 = smul.addr %s183, 8
        %s185 = scalar_lea.vmem %s0, %s184
        %s186 = smul.u32 19, %s11
      $region36: #{autoencoder_forward.1} parent=31 // pred_fallthru
        _
    $region32: #{autoencoder_forward.1} parent=5 // pred_fallthru
      _
    %p187 = scmp.le.s32.totalorder 1, %s11
    %p188 = scmp.lt.s32.totalorder %s11, 3
    %p189 = pnand %p187, %p188
    %p190 = pneg %p189
    // Predicated region
    $region37: #{autoencoder_forward.1} parent=5 // pred_check
      _
    $region38: #{autoencoder_forward.1} parent=5 // pred_check_branch
      %192 = sbr.rel (%p189) target = $region40
    $region39: #{autoencoder_forward.1} parent=5 // pred_region
      %s193 = ssub.s32 %s11, 1
      %s194 = smul.u32 19, %s16
      %p195 = scmp.lt.s32.totalorder %s194, 37
      %s196 = scalar_select %p195, %s194, 37
      %s197 = smul.addr %s196, 8
      %s198 = scalar_lea.vmem %s0, %s197
      %p199 = pneg %p37
      %p200 = pneg %p34
      %p201 = pneg %p58
      %p202 = pneg %p55
      %p203 = pneg %p79
      %p204 = pneg %p76
      %p205 = pneg %p100
      %p206 = pneg %p97
      %p207 = pneg %p121
      %p208 = pneg %p118
      %p209 = pneg %p147
      %p210 = pneg %p144
      %s211 = smul.u32 19, %s16
      %p212 = scmp.lt.s32.totalorder %s211, 37
      %s213 = scalar_select %p212, %s211, 37
      %s214 = smul.addr %s213, 8
      %s215 = scalar_lea.vmem %s5, %s214
      %s216 = smul.u32 19, %s16
      %p217 = scmp.lt.s32.totalorder %s216, 37
      %s218 = scalar_select %p217, %s216, 37
      %s219 = smul.addr %s218, 8
      %s220 = scalar_lea.vmem %s0, %s219
      %s221 = smul.u32 19, %s16
      %s222 = smul.u32 19, %s16
      %p223 = scmp.lt.s32.totalorder %s222, 37
      %s224 = scalar_select %p223, %s222, 37
      %s225 = smul.addr %s224, 8
      %s226 = scalar_lea.vmem %s5, %s225
      %s227 = smul.u32 19, %s16
      %v228 = vld [vmem:[%s220] sm:$0xff]
      %v229 = vld [vmem:[%s220 + $0x8] sm:$0xff]
      %v230 = vld [vmem:[%s220 + $0x10] sm:$0xff]
      %v231 = vld [vmem:[%s220 + $0x18] sm:$0xff]
      %v232 = vld [vmem:[%s220 + $0x20] sm:$0xff]
      %v233 = vld [vmem:[%s220 + $0x28] sm:$0xff]
      %v234 = vld [vmem:[%s220 + $0x30] sm:$0xff]
      %v235 = vld [vmem:[%s220 + $0x38] sm:$0xff]
      %v236 = vld [vmem:[%s220 + $0x40] sm:$0xff]
      %v237 = vld [vmem:[%s220 + $0x48] sm:$0xff]
      %v238 = vld [vmem:[%s220 + $0x50] sm:$0xff]
      %v239 = vld [vmem:[%s220 + $0x58] sm:$0xff]
      %v240 = vld [vmem:[%s220 + $0x60] sm:$0xff]
      %v241 = vld [vmem:[%s220 + $0x68] sm:$0xff]
      %v242 = vld [vmem:[%s220 + $0x70] sm:$0xff]
      %v243 = vld [vmem:[%s220 + $0x78] sm:$0xff]
      %v244 = vld [vmem:[%s220 + $0x80] sm:$0xff]
      %v245 = vld [vmem:[%s220 + $0x88] sm:$0xff]
      %v246 = vld [vmem:[%s220 + $0x90] sm:$0xff]
      %v247 = vld [vmem:[%s1] sm:$0xff]
      %v248 = vld [vmem:[%s1 + $0x8] sm:$0xff]
      %v249 = vld [vmem:[%s1 + $0x10] sm:$0xff]
      %v250 = vld [vmem:[%s1 + $0x18] sm:$0xff]
      %v251 = vld [vmem:[%s1 + $0x20] sm:$0xff]
      %v252 = vld [vmem:[%s1 + $0x28] sm:$0xff]
      %v253 = vld [vmem:[%s1 + $0x30] sm:$0xff]
      %v254 = vld [vmem:[%s1 + $0x38] sm:$0xff]
      %v255 = vld [vmem:[%s2] sm:$0x1]
      %v257 = vlaneseq
      %v258 = vshrl.u32 %v257, 7
      %v259 = vsub.s32 0, %v258
      %v260 = vrot.slane %v255, %v259
      %vm262 = vcmask 523264
      %v264 = vsel %vm262, %v228, 0
      %v267 = vsel %vm262, %v229, 0
      %v270 = vsel %vm262, %v230, 0
      %v273 = vsel %vm262, %v231, 0
      %v276 = vsel %vm262, %v232, 0
      %v279 = vsel %vm262, %v233, 0
      %v282 = vsel %vm262, %v234, 0
      %v285 = vsel %vm262, %v235, 0
      %v288 = vsel %vm262, %v236, 0
      %v291 = vsel %vm262, %v237, 0
      %v294 = vsel %vm262, %v238, 0
      %v297 = vsel %vm262, %v239, 0
      %v300 = vsel %vm262, %v240, 0
      %v303 = vsel %vm262, %v241, 0
      %v306 = vsel %vm262, %v242, 0
      %v309 = vsel %vm262, %v243, 0
      %v312 = vsel %vm262, %v244, 0
      %v315 = vsel %vm262, %v245, 0
      %v318 = vsel %vm262, %v246, 0
      %320 = vmatprep.subr.mxu0 0.0
      %321 = vmatpush1.msra.mxu0 0.0
      %322 = vmatprep.subr.mxu0 0.0
      %323 = vmatpush1.msra.mxu0 0.0
      %324 = vmatprep.subr.mxu0 0.0
      %325 = vmatpush1.msra.mxu0 0.0
      %326 = vmatprep.subr.mxu0 0.0
      %327 = vmatpush1.msra.mxu0 0.0
      %328 = vmatprep.subr.mxu0 0.0
      %329 = vmatpush1.msra.mxu0 0.0
      %330 = vmatprep.subr.mxu0 0.0
      %331 = vmatpush1.msra.mxu0 0.0
      %332 = vmatprep.subr.mxu0 0.0
      %333 = vmatpush1.msra.mxu0 0.0
      %334 = vmatprep.subr.mxu0 0.0
      %335 = vmatpush1.msra.mxu0 0.0
      %336 = vmatprep.subr.mxu0 0.0
      %337 = vmatpush1.msra.mxu0 %v254
      %338 = vmatprep.subr.mxu0 0.0
      %339 = vmatpush1.msra.mxu0 %v253
      %340 = vmatprep.subr.mxu0 0.0
      %341 = vmatpush1.msra.mxu0 %v252
      %342 = vmatprep.subr.mxu0 0.0
      %343 = vmatpush1.msra.mxu0 %v251
      %344 = vmatprep.subr.mxu0 0.0
      %345 = vmatpush1.msra.mxu0 %v250
      %346 = vmatprep.subr.mxu0 0.0
      %347 = vmatpush1.msra.mxu0 %v249
      %348 = vmatprep.subr.mxu0 0.0
      %349 = vmatpush1.msra.mxu0 %v248
      %350 = vmatprep.subr.mxu0 0.0
      %351 = vmatpush1.msra.mxu0 %v247
      %352 = vmatprep.subr.mxu0 0.0
      %353 = vmatpush2.msra.mxu0 0.0
      %354 = vmatprep.subr.mxu0 0.0
      %355 = vmatpush2.msra.mxu0 0.0
      %356 = vmatprep.subr.mxu0 0.0
      %357 = vmatpush2.msra.mxu0 0.0
      %358 = vmatprep.subr.mxu0 0.0
      %359 = vmatpush2.msra.mxu0 0.0
      %360 = vmatprep.subr.mxu0 0.0
      %361 = vmatpush2.msra.mxu0 0.0
      %362 = vmatprep.subr.mxu0 0.0
      %363 = vmatpush2.msra.mxu0 0.0
      %364 = vmatprep.subr.mxu0 0.0
      %365 = vmatpush2.msra.mxu0 0.0
      %366 = vmatprep.subr.mxu0 0.0
      %367 = vmatpush2.msra.mxu0 0.0
      %368 = vmatprep.subr.mxu0 0.0
      %369 = vmatpush2.msra.mxu0 0.0
      %370 = vmatprep.subr.mxu0 0.0
      %371 = vmatpush2.msra.mxu0 0.0
      %372 = vmatprep.subr.mxu0 0.0
      %373 = vmatpush2.msra.mxu0 0.0
      %374 = vmatprep.subr.mxu0 0.0
      %375 = vmatpush2.msra.mxu0 0.0
      %376 = vmatprep.subr.mxu0 0.0
      %377 = vmatpush2.msra.mxu0 0.0
      %378 = vmatprep.subr.mxu0 0.0
      %379 = vmatpush2.msra.mxu0 0.0
      %380 = vmatprep.subr.mxu0 0.0
      %381 = vmatpush2.msra.mxu0 0.0
      %382 = vmatprep.subr.mxu0 0.0
      %383 = vmatpush2.msra.mxu0 0.0
      %384 = vmatprep.mubr.f32.mxu0 0.0
      %385 = vmatmul.mubr.f32.gmra.mxu0 %v264
      %v386 = vpop.f32.mrf.mxu0
      %v387 = vadd.f32 %v260, %v386
      %v388 = vpop.f32.mrf.mxu0
      %389 = vmatprep.mubr.f32.mxu0 0.0
      %390 = vmatmul.mubr.f32.gmra.mxu0 %v267
      %v391 = vpop.f32.mrf.mxu0
      %v392 = vadd.f32 %v260, %v391
      %v393 = vpop.f32.mrf.mxu0
      %394 = vmatprep.mubr.f32.mxu0 0.0
      %395 = vmatmul.mubr.f32.gmra.mxu0 %v270
      %v396 = vpop.f32.mrf.mxu0
      %v397 = vadd.f32 %v260, %v396
      %v398 = vpop.f32.mrf.mxu0
      %399 = vmatprep.mubr.f32.mxu0 0.0
      %400 = vmatmul.mubr.f32.gmra.mxu0 %v273
      %v401 = vpop.f32.mrf.mxu0
      %v402 = vadd.f32 %v260, %v401
      %v403 = vpop.f32.mrf.mxu0
      %404 = vmatprep.mubr.f32.mxu0 0.0
      %405 = vmatmul.mubr.f32.gmra.mxu0 %v276
      %v406 = vpop.f32.mrf.mxu0
      %v407 = vadd.f32 %v260, %v406
      %v408 = vpop.f32.mrf.mxu0
      %409 = vmatprep.mubr.f32.mxu0 0.0
      %410 = vmatmul.mubr.f32.gmra.mxu0 %v279
      %v411 = vpop.f32.mrf.mxu0
      %v412 = vadd.f32 %v260, %v411
      %v413 = vpop.f32.mrf.mxu0
      %414 = vmatprep.mubr.f32.mxu0 0.0
      %415 = vmatmul.mubr.f32.gmra.mxu0 %v282
      %v416 = vpop.f32.mrf.mxu0
      %v417 = vadd.f32 %v260, %v416
      %v418 = vpop.f32.mrf.mxu0
      %419 = vmatprep.mubr.f32.mxu0 0.0
      %420 = vmatmul.mubr.f32.gmra.mxu0 %v285
      %v421 = vpop.f32.mrf.mxu0
      %v422 = vadd.f32 %v260, %v421
      %v423 = vpop.f32.mrf.mxu0
      %424 = vmatprep.mubr.f32.mxu0 0.0
      %425 = vmatmul.mubr.f32.gmra.mxu0 %v288
      %v426 = vpop.f32.mrf.mxu0
      %v427 = vadd.f32 %v260, %v426
      %v428 = vpop.f32.mrf.mxu0
      %429 = vmatprep.mubr.f32.mxu0 0.0
      %430 = vmatmul.mubr.f32.gmra.mxu0 %v291
      %v431 = vpop.f32.mrf.mxu0
      %v432 = vadd.f32 %v260, %v431
      %v433 = vpop.f32.mrf.mxu0
      %434 = vmatprep.mubr.f32.mxu0 0.0
      %435 = vmatmul.mubr.f32.gmra.mxu0 %v294
      %v436 = vpop.f32.mrf.mxu0
      %v437 = vadd.f32 %v260, %v436
      %v438 = vpop.f32.mrf.mxu0
      %439 = vmatprep.mubr.f32.mxu0 0.0
      %440 = vmatmul.mubr.f32.gmra.mxu0 %v297
      %v441 = vpop.f32.mrf.mxu0
      %v442 = vadd.f32 %v260, %v441
      %v443 = vpop.f32.mrf.mxu0
      %444 = vmatprep.mubr.f32.mxu0 0.0
      %445 = vmatmul.mubr.f32.gmra.mxu0 %v300
      %v446 = vpop.f32.mrf.mxu0
      %v447 = vadd.f32 %v260, %v446
      %v448 = vpop.f32.mrf.mxu0
      %449 = vmatprep.mubr.f32.mxu0 0.0
      %450 = vmatmul.mubr.f32.gmra.mxu0 %v303
      %v451 = vpop.f32.mrf.mxu0
      %v452 = vadd.f32 %v260, %v451
      %v453 = vpop.f32.mrf.mxu0
      %454 = vmatprep.mubr.f32.mxu0 0.0
      %455 = vmatmul.mubr.f32.gmra.mxu0 %v306
      %v456 = vpop.f32.mrf.mxu0
      %v457 = vadd.f32 %v260, %v456
      %v458 = vpop.f32.mrf.mxu0
      %459 = vmatprep.mubr.f32.mxu0 0.0
      %460 = vmatmul.mubr.f32.gmra.mxu0 %v309
      %v461 = vpop.f32.mrf.mxu0
      %v462 = vadd.f32 %v260, %v461
      %v463 = vpop.f32.mrf.mxu0
      %464 = vmatprep.mubr.f32.mxu0 0.0
      %465 = vmatmul.mubr.f32.gmra.mxu0 %v312
      %v466 = vpop.f32.mrf.mxu0
      %v467 = vadd.f32 %v260, %v466
      %v468 = vpop.f32.mrf.mxu0
      %469 = vmatprep.mubr.f32.mxu0 0.0
      %470 = vmatmul.mubr.f32.gmra.mxu0 %v315
      %v471 = vpop.f32.mrf.mxu0
      %v472 = vadd.f32 %v260, %v471
      %v473 = vpop.f32.mrf.mxu0
      %474 = vmatprep.mubr.f32.mxu0 0.0
      %475 = vmatmul.mubr.f32.gmra.mxu0 %v318
      %v476 = vpop.f32.mrf.mxu0
      %v477 = vadd.f32 %v260, %v476
      %v478 = vpop.f32.mrf.mxu0
      %479 = vdwg.mxu0
      %v480 = vmax.f32 %v387, 0.0
      %v481 = vmax.f32 %v392, 0.0
      %v482 = vmax.f32 %v397, 0.0
      %v483 = vmax.f32 %v402, 0.0
      %v484 = vmax.f32 %v407, 0.0
      %v485 = vmax.f32 %v412, 0.0
      %v486 = vmax.f32 %v417, 0.0
      %v487 = vmax.f32 %v422, 0.0
      %v488 = vmax.f32 %v427, 0.0
      %v489 = vmax.f32 %v432, 0.0
      %v490 = vmax.f32 %v437, 0.0
      %v491 = vmax.f32 %v442, 0.0
      %v492 = vmax.f32 %v447, 0.0
      %v493 = vmax.f32 %v452, 0.0
      %v494 = vmax.f32 %v457, 0.0
      %v495 = vmax.f32 %v462, 0.0
      %v496 = vmax.f32 %v467, 0.0
      %v497 = vmax.f32 %v472, 0.0
      %v498 = vmax.f32 %v477, 0.0
      %v499 = vld [vmem:[%s3] sm:$0xff]
      %v500 = vld [vmem:[%s3 + $0x8] sm:$0xff]
      %v501 = vld [vmem:[%s3 + $0x10] sm:$0xff]
      %v502 = vld [vmem:[%s3 + $0x18] sm:$0xff]
      %v503 = vld [vmem:[%s3 + $0x20] sm:$0xff]
      %v504 = vld [vmem:[%s3 + $0x28] sm:$0xff]
      %v505 = vld [vmem:[%s3 + $0x30] sm:$0xff]
      %v506 = vld [vmem:[%s3 + $0x38] sm:$0xff]
      %v507 = vld [vmem:[%s3 + $0x40] sm:$0xff]
      %v508 = vld [vmem:[%s3 + $0x48] sm:$0xff]
      %v509 = vld [vmem:[%s3 + $0x50] sm:$0xff]
      %v510 = vld [vmem:[%s3 + $0x58] sm:$0xff]
      %v511 = vld [vmem:[%s3 + $0x60] sm:$0xff]
      %v512 = vld [vmem:[%s3 + $0x68] sm:$0xff]
      %v513 = vld [vmem:[%s3 + $0x70] sm:$0xff]
      %v514 = vld [vmem:[%s3 + $0x78] sm:$0xff]
      %v515 = vld [vmem:[%s4] sm:$0x1]
      %v517 = vlaneseq
      %v518 = vshrl.u32 %v517, 7
      %v519 = vsub.s32 0, %v518
      %v520 = vrot.slane %v515, %v519
      %522 = vmatprep.subr.mxu0 0.0
      %523 = vmatpush1.msra.mxu0 %v514
      %524 = vmatprep.subr.mxu0 0.0
      %525 = vmatpush1.msra.mxu0 %v513
      %526 = vmatprep.subr.mxu0 0.0
      %527 = vmatpush1.msra.mxu0 %v512
      %528 = vmatprep.subr.mxu0 0.0
      %529 = vmatpush1.msra.mxu0 %v511
      %530 = vmatprep.subr.mxu0 0.0
      %531 = vmatpush1.msra.mxu0 %v510
      %532 = vmatprep.subr.mxu0 0.0
      %533 = vmatpush1.msra.mxu0 %v509
      %534 = vmatprep.subr.mxu0 0.0
      %535 = vmatpush1.msra.mxu0 %v508
      %536 = vmatprep.subr.mxu0 0.0
      %537 = vmatpush1.msra.mxu0 %v507
      %538 = vmatprep.subr.mxu0 0.0
      %539 = vmatpush1.msra.mxu0 %v506
      %540 = vmatprep.subr.mxu0 0.0
      %541 = vmatpush1.msra.mxu0 %v505
      %542 = vmatprep.subr.mxu0 0.0
      %543 = vmatpush1.msra.mxu0 %v504
      %544 = vmatprep.subr.mxu0 0.0
      %545 = vmatpush1.msra.mxu0 %v503
      %546 = vmatprep.subr.mxu0 0.0
      %547 = vmatpush1.msra.mxu0 %v502
      %548 = vmatprep.subr.mxu0 0.0
      %549 = vmatpush1.msra.mxu0 %v501
      %550 = vmatprep.subr.mxu0 0.0
      %551 = vmatpush1.msra.mxu0 %v500
      %552 = vmatprep.subr.mxu0 0.0
      %553 = vmatpush1.msra.mxu0 %v499
      %554 = vmatprep.subr.mxu0 0.0
      %555 = vmatpush2.msra.mxu0 0.0
      %556 = vmatprep.subr.mxu0 0.0
      %557 = vmatpush2.msra.mxu0 0.0
      %558 = vmatprep.subr.mxu0 0.0
      %559 = vmatpush2.msra.mxu0 0.0
      %560 = vmatprep.subr.mxu0 0.0
      %561 = vmatpush2.msra.mxu0 0.0
      %562 = vmatprep.subr.mxu0 0.0
      %563 = vmatpush2.msra.mxu0 0.0
      %564 = vmatprep.subr.mxu0 0.0
      %565 = vmatpush2.msra.mxu0 0.0
      %566 = vmatprep.subr.mxu0 0.0
      %567 = vmatpush2.msra.mxu0 0.0
      %568 = vmatprep.subr.mxu0 0.0
      %569 = vmatpush2.msra.mxu0 0.0
      %570 = vmatprep.subr.mxu0 0.0
      %571 = vmatpush2.msra.mxu0 0.0
      %572 = vmatprep.subr.mxu0 0.0
      %573 = vmatpush2.msra.mxu0 0.0
      %574 = vmatprep.subr.mxu0 0.0
      %575 = vmatpush2.msra.mxu0 0.0
      %576 = vmatprep.subr.mxu0 0.0
      %577 = vmatpush2.msra.mxu0 0.0
      %578 = vmatprep.subr.mxu0 0.0
      %579 = vmatpush2.msra.mxu0 0.0
      %580 = vmatprep.subr.mxu0 0.0
      %581 = vmatpush2.msra.mxu0 0.0
      %582 = vmatprep.subr.mxu0 0.0
      %583 = vmatpush2.msra.mxu0 0.0
      %584 = vmatprep.subr.mxu0 0.0
      %585 = vmatpush2.msra.mxu0 0.0
      %586 = vmatprep.mubr.f32.mxu0 0.0
      %587 = vmatmul.mubr.f32.gmra.mxu0 %v480
      %v588 = vpop.f32.mrf.mxu0
      %v589 = vadd.f32 %v520, %v588
      %v590 = vpop.f32.mrf.mxu0
      %591 = vmatprep.mubr.f32.mxu0 0.0
      %592 = vmatmul.mubr.f32.gmra.mxu0 %v481
      %v593 = vpop.f32.mrf.mxu0
      %v594 = vadd.f32 %v520, %v593
      %v595 = vpop.f32.mrf.mxu0
      %596 = vmatprep.mubr.f32.mxu0 0.0
      %597 = vmatmul.mubr.f32.gmra.mxu0 %v482
      %v598 = vpop.f32.mrf.mxu0
      %v599 = vadd.f32 %v520, %v598
      %v600 = vpop.f32.mrf.mxu0
      %601 = vmatprep.mubr.f32.mxu0 0.0
      %602 = vmatmul.mubr.f32.gmra.mxu0 %v483
      %v603 = vpop.f32.mrf.mxu0
      %v604 = vadd.f32 %v520, %v603
      %v605 = vpop.f32.mrf.mxu0
      %606 = vmatprep.mubr.f32.mxu0 0.0
      %607 = vmatmul.mubr.f32.gmra.mxu0 %v484
      %v608 = vpop.f32.mrf.mxu0
      %v609 = vadd.f32 %v520, %v608
      %v610 = vpop.f32.mrf.mxu0
      %611 = vmatprep.mubr.f32.mxu0 0.0
      %612 = vmatmul.mubr.f32.gmra.mxu0 %v485
      %v613 = vpop.f32.mrf.mxu0
      %v614 = vadd.f32 %v520, %v613
      %v615 = vpop.f32.mrf.mxu0
      %616 = vmatprep.mubr.f32.mxu0 0.0
      %617 = vmatmul.mubr.f32.gmra.mxu0 %v486
      %v618 = vpop.f32.mrf.mxu0
      %v619 = vadd.f32 %v520, %v618
      %v620 = vpop.f32.mrf.mxu0
      %621 = vmatprep.mubr.f32.mxu0 0.0
      %622 = vmatmul.mubr.f32.gmra.mxu0 %v487
      %v623 = vpop.f32.mrf.mxu0
      %v624 = vadd.f32 %v520, %v623
      %v625 = vpop.f32.mrf.mxu0
      %626 = vmatprep.mubr.f32.mxu0 0.0
      %627 = vmatmul.mubr.f32.gmra.mxu0 %v488
      %v628 = vpop.f32.mrf.mxu0
      %v629 = vadd.f32 %v520, %v628
      %v630 = vpop.f32.mrf.mxu0
      %631 = vmatprep.mubr.f32.mxu0 0.0
      %632 = vmatmul.mubr.f32.gmra.mxu0 %v489
      %v633 = vpop.f32.mrf.mxu0
      %v634 = vadd.f32 %v520, %v633
      %v635 = vpop.f32.mrf.mxu0
      %636 = vmatprep.mubr.f32.mxu0 0.0
      %637 = vmatmul.mubr.f32.gmra.mxu0 %v490
      %v638 = vpop.f32.mrf.mxu0
      %v639 = vadd.f32 %v520, %v638
      %v640 = vpop.f32.mrf.mxu0
      %641 = vmatprep.mubr.f32.mxu0 0.0
      %642 = vmatmul.mubr.f32.gmra.mxu0 %v491
      %v643 = vpop.f32.mrf.mxu0
      %v644 = vadd.f32 %v520, %v643
      %v645 = vpop.f32.mrf.mxu0
      %646 = vmatprep.mubr.f32.mxu0 0.0
      %647 = vmatmul.mubr.f32.gmra.mxu0 %v492
      %v648 = vpop.f32.mrf.mxu0
      %v649 = vadd.f32 %v520, %v648
      %v650 = vpop.f32.mrf.mxu0
      %651 = vmatprep.mubr.f32.mxu0 0.0
      %652 = vmatmul.mubr.f32.gmra.mxu0 %v493
      %v653 = vpop.f32.mrf.mxu0
      %v654 = vadd.f32 %v520, %v653
      %v655 = vpop.f32.mrf.mxu0
      %656 = vmatprep.mubr.f32.mxu0 0.0
      %657 = vmatmul.mubr.f32.gmra.mxu0 %v494
      %v658 = vpop.f32.mrf.mxu0
      %v659 = vadd.f32 %v520, %v658
      %v660 = vpop.f32.mrf.mxu0
      %661 = vmatprep.mubr.f32.mxu0 0.0
      %662 = vmatmul.mubr.f32.gmra.mxu0 %v495
      %v663 = vpop.f32.mrf.mxu0
      %v664 = vadd.f32 %v520, %v663
      %v665 = vpop.f32.mrf.mxu0
      %666 = vmatprep.mubr.f32.mxu0 0.0
      %667 = vmatmul.mubr.f32.gmra.mxu0 %v496
      %v668 = vpop.f32.mrf.mxu0
      %v669 = vadd.f32 %v520, %v668
      %v670 = vpop.f32.mrf.mxu0
      %671 = vmatprep.mubr.f32.mxu0 0.0
      %672 = vmatmul.mubr.f32.gmra.mxu0 %v497
      %v673 = vpop.f32.mrf.mxu0
      %v674 = vadd.f32 %v520, %v673
      %v675 = vpop.f32.mrf.mxu0
      %676 = vmatprep.mubr.f32.mxu0 0.0
      %677 = vmatmul.mubr.f32.gmra.mxu0 %v498
      %v678 = vpop.f32.mrf.mxu0
      %v679 = vadd.f32 %v520, %v678
      %v680 = vpop.f32.mrf.mxu0
      %681 = vdwg.mxu0
      %v682 = vmax.f32 %v589, 0.0
      %v683 = vmax.f32 %v594, 0.0
      %v684 = vmax.f32 %v599, 0.0
      %v685 = vmax.f32 %v604, 0.0
      %v686 = vmax.f32 %v609, 0.0
      %v687 = vmax.f32 %v614, 0.0
      %v688 = vmax.f32 %v619, 0.0
      %v689 = vmax.f32 %v624, 0.0
      %v690 = vmax.f32 %v629, 0.0
      %v691 = vmax.f32 %v634, 0.0
      %v692 = vmax.f32 %v639, 0.0
      %v693 = vmax.f32 %v644, 0.0
      %v694 = vmax.f32 %v649, 0.0
      %v695 = vmax.f32 %v654, 0.0
      %v696 = vmax.f32 %v659, 0.0
      %v697 = vmax.f32 %v664, 0.0
      %v698 = vmax.f32 %v669, 0.0
      %v699 = vmax.f32 %v674, 0.0
      %v700 = vmax.f32 %v679, 0.0
      %701 = vst [vmem:[%s226] sm:$0xff] %v682
      %702 = vst [vmem:[%s226 + $0x8] sm:$0xff] %v683
      %703 = vst [vmem:[%s226 + $0x10] sm:$0xff] %v684
      %704 = vst [vmem:[%s226 + $0x18] sm:$0xff] %v685
      %705 = vst [vmem:[%s226 + $0x20] sm:$0xff] %v686
      %706 = vst [vmem:[%s226 + $0x28] sm:$0xff] %v687
      %707 = vst [vmem:[%s226 + $0x30] sm:$0xff] %v688
      %708 = vst [vmem:[%s226 + $0x38] sm:$0xff] %v689
      %709 = vst [vmem:[%s226 + $0x40] sm:$0xff] %v690
      %710 = vst [vmem:[%s226 + $0x48] sm:$0xff] %v691
      %711 = vst [vmem:[%s226 + $0x50] sm:$0xff] %v692
      %712 = vst [vmem:[%s226 + $0x58] sm:$0xff] %v693
      %713 = vst [vmem:[%s226 + $0x60] sm:$0xff] %v694
      %714 = vst [vmem:[%s226 + $0x68] sm:$0xff] %v695
      %715 = vst [vmem:[%s226 + $0x70] sm:$0xff] %v696
      %716 = vst [vmem:[%s226 + $0x78] sm:$0xff] %v697
      %717 = vst [vmem:[%s226 + $0x80] sm:$0xff] %v698
      %718 = vst [vmem:[%s226 + $0x88] sm:$0xff] %v699
      %719 = vst [vmem:[%s226 + $0x90] sm:$0xff] %v700
      %s720 = smul.u32 19, %s16
      %p721 = scmp.lt.s32.totalorder %s720, 37
      %s722 = scalar_select %p721, %s720, 37
      %s723 = smul.addr %s722, 8
      %s724 = scalar_lea.vmem %s5, %s723
      // Predicated region
      $region41: #{autoencoder_forward.1} parent=39 // pred_check
        %p725 = pneg %p144
      $region42: #{autoencoder_forward.1} parent=39 // pred_check_branch
        %727 = sbr.rel (%p725) target = $region44
      $region43: #{autoencoder_forward.1} parent=39 // pred_region
        %s728 = smul.u32 19, %s16
      $region44: #{autoencoder_forward.1} parent=39 // pred_fallthru
        _
    $region40: #{autoencoder_forward.1} parent=5 // pred_fallthru
      _
    %p729 = scmp.le.s32.totalorder 2, %s11
    // Predicated region
    $region45: #{autoencoder_forward.1} parent=5 // pred_check
      %p730 = pneg %p729
    $region46: #{autoencoder_forward.1} parent=5 // pred_check_branch
      %732 = sbr.rel (%p730) target = $region48
    $region47: #{autoencoder_forward.1} parent=5 // pred_region
      %s733 = ssub.s32 %s11, 2
      // Predicated region
      $region49: #{autoencoder_forward.1} parent=47 // pred_check
        %p734 = pneg %p150
      $region50: #{autoencoder_forward.1} parent=47 // pred_check_branch
        %736 = sbr.rel (%p734) target = $region52
      $region51: #{autoencoder_forward.1} parent=47 // pred_region
        %s737 = smul.u32 19, %s17
        %p738 = scmp.lt.s32.totalorder %s737, 37
        %s739 = scalar_select %p738, %s737, 37
        %s740 = smul.addr %s739, 8
        %s741 = scalar_lea.vmem %s5, %s740
      $region52: #{autoencoder_forward.1} parent=47 // pred_fallthru
        _
    $region48: #{autoencoder_forward.1} parent=5 // pred_fallthru
      _
  $region6: #{autoencoder_forward.1} parent=0 // loop_footer
    %s15 = sadd.s32 1, %s11
  $region7: #{autoencoder_forward.1} parent=0 // loop_footer_branch
    %10 = sbr.rel target = $region3
  $region8: #{autoencoder_forward.1} parent=0 // loop_exit
    _

</llo_original>
